<compile_context>
chip_gen: v7x
topology: tpu7x:2x2x1
jax: 0.10.0
libtpu: 0.0.40
codegen_flags: <defaults>
</compile_context>

<pallas_src>
import functools

import numpy as np
import jax
import jax.numpy as jnp
from jax.experimental import pallas as pl
from jax.experimental.pallas import tpu as pltpu


def _round_up(x: int, m: int) -> int:
    return ((x + m - 1) // m) * m


def _bilinear_weight_matrix(in_size: int, scale_factor: float) -> np.ndarray:
    """1-D interpolation matrix matching torch.nn.Upsample(mode='bilinear',
    align_corners=False) along one axis:  out = W @ in.

    PyTorch (with scale_factor given, recompute_scale_factor=None) uses
    src = (dst + 0.5) / scale - 0.5, clamped at 0, then linear interpolation
    between floor(src) and floor(src)+1 (clamped to the last index).
    """
    out_size = int(np.floor(in_size * scale_factor))
    coord_scale = 1.0 / float(scale_factor)
    w = np.zeros((out_size, in_size), dtype=np.float32)
    for i in range(out_size):
        src = (i + 0.5) * coord_scale - 0.5
        src = max(src, 0.0)
        x0 = min(int(np.floor(src)), in_size - 1)
        x1 = min(x0 + 1, in_size - 1)
        lam = src - x0
        w[i, x0] += 1.0 - lam
        w[i, x1] += lam
    return w


@functools.lru_cache(maxsize=None)
def _kron_weight(h: int, w: int, scale_factor: float):
    """Fused (H*W, Hout*Wout) interpolation matrix, built once per shape/scale."""
    wh = _bilinear_weight_matrix(h, scale_factor)          # (Hout, H)
    ww = _bilinear_weight_matrix(w, scale_factor)          # (Wout, W)
    h_out, w_out = wh.shape[0], ww.shape[0]
    # kron(Wh, Ww)[ho*Wout+wo, h*W+w] = Wh[ho,h] * Ww[wo,w]
    # Transposed so the kernel computes  out_flat = x_flat @ Wk  (K=H*W, N=Hout*Wout).
    wk = np.ascontiguousarray(np.kron(wh, ww).T.astype(np.float32))
    return jnp.asarray(wk), h_out, w_out


def _upsample_kernel(x_ref, wk_ref, o_ref):
    # x_ref:  (M_TILE, H*W)         batch of flattened images
    # wk_ref: (H*W, Hout*Wout)      fused interpolation matrix (resident)
    # o_ref:  (M_TILE, Hout*Wout)   lane-dense output block
    o_ref[...] = jnp.dot(
        x_ref[...], wk_ref[...], preferred_element_type=jnp.float32
    ).astype(o_ref.dtype)


def stepwise_bilinear_block(x: jax.Array, scale_factor: float,
                            m_tile: int = 512) -> jax.Array:
    """x: (n_batch, n_seq, C, H, W) -> (n_batch, n_seq, C, H*sf, W*sf)."""
    n_batch, n_seq, c, h, w = x.shape
    wk, h_out, w_out = _kron_weight(h, w, float(scale_factor))
    k = h * w
    n_out = h_out * w_out
    n = n_batch * n_seq * c

    # Flatten every (batch, seq, channel) image into one row.
    x_flat = x.reshape(n, k)

    # Batch many rows per grid step; pad row count up to a tile multiple so the
    # grid divides evenly (padded rows are zero and sliced off afterwards).
    m_tile = min(m_tile, _round_up(n, 8))
    n_pad = _round_up(n, m_tile)
    if n_pad != n:
        x_flat = jnp.pad(x_flat, ((0, n_pad - n), (0, 0)))
    grid = (n_pad // m_tile,)

    cost = pl.CostEstimate(
        flops=2 * n_pad * k * n_out,
        transcendentals=0,
        bytes_accessed=(n_pad * k * x_flat.dtype.itemsize
                        + n_pad * n_out * x.dtype.itemsize
                        + wk.size * wk.dtype.itemsize),
    )

    out_flat = pl.pallas_call(
        _upsample_kernel,
        out_shape=jax.ShapeDtypeStruct((n_pad, n_out), x.dtype),
        grid_spec=pltpu.PrefetchScalarGridSpec(
            num_scalar_prefetch=0,
            grid=grid,
            in_specs=[
                pl.BlockSpec((m_tile, k), lambda i: (i, 0)),
                pl.BlockSpec((k, n_out), lambda i: (0, 0)),
            ],
            out_specs=pl.BlockSpec((m_tile, n_out), lambda i: (i, 0)),
        ),
        compiler_params=pltpu.CompilerParams(
            dimension_semantics=("parallel",),
            vmem_limit_bytes=32 * 1024 * 1024,
        ),
        cost_estimate=cost,
    )(x_flat, wk)

    out_flat = out_flat[:n]
    return out_flat.reshape(n_batch, n_seq, c, h_out, w_out)


if __name__ == "__main__":
    scale_factor = 2
    n_batch, n_seq, c, h, w = 2, 3, 4, 16, 16

    key = jax.random.PRNGKey(0)
    x = jax.random.normal(key, (n_batch, n_seq, c, h, w), dtype=jnp.float32)

    out = stepwise_bilinear_block(x, scale_factor)
    out = jax.block_until_ready(out)

    # Pure-JAX reference using the same separable interpolation matrices.
    wh = jnp.asarray(_bilinear_weight_matrix(h, scale_factor))
    ww = jnp.asarray(_bilinear_weight_matrix(w, scale_factor))
    ref = jnp.einsum("oh,nhw,qw->noq", wh, x.reshape(-1, h, w), ww)
    ref = ref.reshape(n_batch, n_seq, c, wh.shape[0], ww.shape[0])

    assert out.shape == (n_batch, n_seq, c, h * scale_factor, w * scale_factor)
    assert out.dtype == x.dtype
    np.testing.assert_allclose(np.asarray(out), np.asarray(ref), rtol=1e-5, atol=1e-5)

    print("KERNEL_OK")
</pallas_src>

<mosaic_0001>
module attributes {stable_mosaic.version = 11 : i64} {
  func.func @_upsample_kernel(%arg0: i32, %arg1: memref<24x256xf32, #tpu.memory_space<vmem>>, %arg2: memref<256x1024xf32, #tpu.memory_space<vmem>>, %arg3: memref<24x1024xf32, #tpu.memory_space<vmem>>) attributes {dimension_semantics = [#tpu.dimension_semantics<parallel>], iteration_bounds = array<i64: 1>, scalar_prefetch = 0 : i64, scratch_operands = 0 : i64, tpu.core_type = #tpu.core_type<tc>, window_params = [{transform_indices = @transform_0, window_bounds = array<i64: 24, 256>}, {pipeline_mode = #tpu.pipeline_mode<synchronous>, transform_indices = @transform_1, window_bounds = array<i64: 256, 1024>}, {transform_indices = @transform_2, window_bounds = array<i64: 24, 1024>}]} {
    %c0 = arith.constant 0 : index
    %c0_0 = arith.constant 0 : index
    %0 = vector.load %arg1[%c0, %c0_0] : memref<24x256xf32, #tpu.memory_space<vmem>>, vector<24x256xf32>
    %c0_1 = arith.constant 0 : index
    %c0_2 = arith.constant 0 : index
    %1 = vector.load %arg2[%c0_1, %c0_2] : memref<256x1024xf32, #tpu.memory_space<vmem>>, vector<256x1024xf32>
    %cst = arith.constant dense<0.000000e+00> : vector<24x1024xf32>
    %2 = tpu.matmul %0, %1, %cst {dimension_numbers = #tpu.dot_dimension_numbers<[1], [0], [0], [1], [0, 0, 1, 1], [], []>} : vector<24x256xf32>, vector<256x1024xf32>, vector<24x1024xf32> -> vector<24x1024xf32>
    %c0_3 = arith.constant 0 : index
    %c0_4 = arith.constant 0 : index
    %3 = vector.load %arg3[%c0_3, %c0_4] : memref<24x1024xf32, #tpu.memory_space<vmem>>, vector<24x1024xf32>
    tpu.vector_store %arg3[%c0_3, %c0_4], %2 {strides = array<i32>} : memref<24x1024xf32, #tpu.memory_space<vmem>>, vector<24x1024xf32>,
    return
  }
  func.func @transform_0(%arg0: i32) -> (i32, i32) {
    %c0_i32 = arith.constant 0 : i32
    %c0_i32_0 = arith.constant 0 : i32
    return %arg0, %c0_i32 : i32, i32
  }
  func.func @transform_1(%arg0: i32) -> (i32, i32) {
    %c0_i32 = arith.constant 0 : i32
    %c0_i32_0 = arith.constant 0 : i32
    %c0_i32_1 = arith.constant 0 : i32
    return %c0_i32, %c0_i32_0 : i32, i32
  }
  func.func @transform_2(%arg0: i32) -> (i32, i32) {
    %c0_i32 = arith.constant 0 : i32
    %c0_i32_0 = arith.constant 0 : i32
    return %arg0, %c0_i32 : i32, i32
  }
}

</mosaic_0001>

<llo_original>
// kernel: tpu_custom_call.1
$region0: #{tpu_custom_call.1}
  #allocation0 [shape = 'u32[]', space=smem, size = 0x4, offset = 0x4, fixed_abs, tag = 'smem constant byte address 0x4 - core index']
  #allocation1 [shape = 'u32[144,128]{1,0:T(1,128)}', space=vmem, size = 0x12000, scoped, tag = 'internal scratch']
  %s0 = inlined_call_operand.hbm [shape: f32[24,256], index: 0, kind: input, shape index: {}]
  %s1 = inlined_call_operand.hbm [shape: f32[256,1024], index: 1, kind: input, shape index: {}]
  %s2 = inlined_call_operand.hbm [shape: f32[24,1024], index: 2, kind: output, shape index: {}]
  %s3 = sld [smem:[#allocation0]]
  $region26: #{tpu_custom_call.1} parent=0
    _
  %s5 = ssub.s32 1, %s3
  %s6 = scalar_select 0, %s5, %s3
  $region1: #{tpu_custom_call.1} parent=0
    #allocation2 [shape = 'u8[24576]{0}', space=vmem, size = 0x6000, scoped, tag = 'input window, operand 0, single buffered']
    #allocation3 [shape = 's32[1]{0}', space=sflag, size = 0x4, scoped, tag = 'scoped memory for tpu_custom_call.1']
    #allocation4 [shape = 's32[1]{0}', space=sflag, size = 0x4, scoped, tag = 'scoped memory for tpu_custom_call.1']
    #allocation5 [shape = 'u8[1048576]{0}', space=vmem, size = 0x100000, scoped, tag = 'input window, operand 1, single buffered']
    #allocation6 [shape = 's32[1]{0}', space=sflag, size = 0x4, scoped, tag = 'scoped memory for tpu_custom_call.1']
    #allocation7 [shape = 'u8[98304]{0}', space=vmem, size = 0x18000, scoped, tag = 'output window, operand 0, single buffered']
    %7 = vsyncpa [#allocation3], 0
    %8 = vsyncpa [#allocation6], 0
    %9 = vsyncpa [#allocation4], 0
    // Predicated region
    $region2: #{tpu_custom_call.1} parent=1 // pred_check
      _
    $region3: #{tpu_custom_call.1} parent=1 // pred_check_branch
      %11 = sbr.rel (0) target = $region5
    $region4: #{tpu_custom_call.1} parent=1 // pred_region
      %s13 = ssub.s32 768, 768
      %14 = vsyncadd [#allocation3], %s13
      %s15 = sshll.u32 [#allocation2], 4
      %s16 = int_to_ptr.vmem [resolvable:$true] %s15
      %21 = dma.hbm_to_vmem [thread:$0]  %s0, 768, %s16, [#allocation3], 256, 256, 16
    $region5: #{tpu_custom_call.1} parent=1 // pred_fallthru
      _
    // Predicated region
    $region6: #{tpu_custom_call.1} parent=1 // pred_check
      _
    $region7: #{tpu_custom_call.1} parent=1 // pred_check_branch
      %23 = sbr.rel (0) target = $region9
    $region8: #{tpu_custom_call.1} parent=1 // pred_region
      %s25 = ssub.s32 32768, 32768
      %26 = vsyncadd [#allocation6], %s25
      %s27 = sshll.u32 [#allocation5], 4
      %s28 = int_to_ptr.vmem [resolvable:$true] %s27
      %33 = dma.hbm_to_vmem [thread:$0]  %s1, 32768, %s28, [#allocation6], 1024, 1024, 64
    $region9: #{tpu_custom_call.1} parent=1 // pred_fallthru
      _
    // Predicated region
    $region10: #{tpu_custom_call.1} parent=1 // pred_check
      _
    $region11: #{tpu_custom_call.1} parent=1 // pred_check_branch
      %35 = sbr.rel (0) target = $region13
    $region12: #{tpu_custom_call.1} parent=1 // pred_region
      %36 = dma.done [#allocation3], 768
    $region13: #{tpu_custom_call.1} parent=1 // pred_fallthru
      _
    // Predicated region
    $region14: #{tpu_custom_call.1} parent=1 // pred_check
      _
    $region15: #{tpu_custom_call.1} parent=1 // pred_check_branch
      %38 = sbr.rel (0) target = $region17
    $region16: #{tpu_custom_call.1} parent=1 // pred_region
      %39 = dma.done [#allocation6], 32768
    $region17: #{tpu_custom_call.1} parent=1 // pred_fallthru
      _
    %v40 = vld [vmem:[#allocation2] sm:$0xff]
    %v41 = vld [vmem:[#allocation2 + $0x8] sm:$0xff]
    %v42 = vld [vmem:[#allocation2 + $0x10] sm:$0xff]
    %v43 = vld [vmem:[#allocation2 + $0x18] sm:$0xff]
    %v44 = vld [vmem:[#allocation2 + $0x20] sm:$0xff]
    %v45 = vld [vmem:[#allocation2 + $0x28] sm:$0xff]
    %v46 = vld [vmem:[#allocation5] sm:$0xff]
    %v47 = vld [vmem:[#allocation5 + $0x8] sm:$0xff]
    %v48 = vld [vmem:[#allocation5 + $0x10] sm:$0xff]
    %v49 = vld [vmem:[#allocation5 + $0x18] sm:$0xff]
    %v50 = vld [vmem:[#allocation5 + $0x20] sm:$0xff]
    %v51 = vld [vmem:[#allocation5 + $0x28] sm:$0xff]
    %v52 = vld [vmem:[#allocation5 + $0x30] sm:$0xff]
    %v53 = vld [vmem:[#allocation5 + $0x38] sm:$0xff]
    %v54 = vld [vmem:[#allocation5 + $0x40] sm:$0xff]
    %v55 = vld [vmem:[#allocation5 + $0x48] sm:$0xff]
    %v56 = vld [vmem:[#allocation5 + $0x50] sm:$0xff]
    %v57 = vld [vmem:[#allocation5 + $0x58] sm:$0xff]
    %v58 = vld [vmem:[#allocation5 + $0x60] sm:$0xff]
    %v59 = vld [vmem:[#allocation5 + $0x68] sm:$0xff]
    %v60 = vld [vmem:[#allocation5 + $0x70] sm:$0xff]
    %v61 = vld [vmem:[#allocation5 + $0x78] sm:$0xff]
    %v62 = vld [vmem:[#allocation5 + $0x80] sm:$0xff]
    %v63 = vld [vmem:[#allocation5 + $0x88] sm:$0xff]
    %v64 = vld [vmem:[#allocation5 + $0x90] sm:$0xff]
    %v65 = vld [vmem:[#allocation5 + $0x98] sm:$0xff]
    %v66 = vld [vmem:[#allocation5 + $0xa0] sm:$0xff]
    %v67 = vld [vmem:[#allocation5 + $0xa8] sm:$0xff]
    %v68 = vld [vmem:[#allocation5 + $0xb0] sm:$0xff]
    %v69 = vld [vmem:[#allocation5 + $0xb8] sm:$0xff]
    %v70 = vld [vmem:[#allocation5 + $0xc0] sm:$0xff]
    %v71 = vld [vmem:[#allocation5 + $0xc8] sm:$0xff]
    %v72 = vld [vmem:[#allocation5 + $0xd0] sm:$0xff]
    %v73 = vld [vmem:[#allocation5 + $0xd8] sm:$0xff]
    %v74 = vld [vmem:[#allocation5 + $0xe0] sm:$0xff]
    %v75 = vld [vmem:[#allocation5 + $0xe8] sm:$0xff]
    %v76 = vld [vmem:[#allocation5 + $0xf0] sm:$0xff]
    %v77 = vld [vmem:[#allocation5 + $0xf8] sm:$0xff]
    %v78 = vld [vmem:[#allocation5 + $0x100] sm:$0xff]
    %v79 = vld [vmem:[#allocation5 + $0x108] sm:$0xff]
    %v80 = vld [vmem:[#allocation5 + $0x110] sm:$0xff]
    %v81 = vld [vmem:[#allocation5 + $0x118] sm:$0xff]
    %v82 = vld [vmem:[#allocation5 + $0x120] sm:$0xff]
    %v83 = vld [vmem:[#allocation5 + $0x128] sm:$0xff]
    %v84 = vld [vmem:[#allocation5 + $0x130] sm:$0xff]
    %v85 = vld [vmem:[#allocation5 + $0x138] sm:$0xff]
    %v86 = vld [vmem:[#allocation5 + $0x140] sm:$0xff]
    %v87 = vld [vmem:[#allocation5 + $0x148] sm:$0xff]
    %v88 = vld [vmem:[#allocation5 + $0x150] sm:$0xff]
    %v89 = vld [vmem:[#allocation5 + $0x158] sm:$0xff]
    %v90 = vld [vmem:[#allocation5 + $0x160] sm:$0xff]
    %v91 = vld [vmem:[#allocation5 + $0x168] sm:$0xff]
    %v92 = vld [vmem:[#allocation5 + $0x170] sm:$0xff]
    %v93 = vld [vmem:[#allocation5 + $0x178] sm:$0xff]
    %v94 = vld [vmem:[#allocation5 + $0x180] sm:$0xff]
    %v95 = vld [vmem:[#allocation5 + $0x188] sm:$0xff]
    %v96 = vld [vmem:[#allocation5 + $0x190] sm:$0xff]
    %v97 = vld [vmem:[#allocation5 + $0x198] sm:$0xff]
    %v98 = vld [vmem:[#allocation5 + $0x1a0] sm:$0xff]
    %v99 = vld [vmem:[#allocation5 + $0x1a8] sm:$0xff]
    %v100 = vld [vmem:[#allocation5 + $0x1b0] sm:$0xff]
    %v101 = vld [vmem:[#allocation5 + $0x1b8] sm:$0xff]
    %v102 = vld [vmem:[#allocation5 + $0x1c0] sm:$0xff]
    %v103 = vld [vmem:[#allocation5 + $0x1c8] sm:$0xff]
    %v104 = vld [vmem:[#allocation5 + $0x1d0] sm:$0xff]
    %v105 = vld [vmem:[#allocation5 + $0x1d8] sm:$0xff]
    %v106 = vld [vmem:[#allocation5 + $0x1e0] sm:$0xff]
    %v107 = vld [vmem:[#allocation5 + $0x1e8] sm:$0xff]
    %v108 = vld [vmem:[#allocation5 + $0x1f0] sm:$0xff]
    %v109 = vld [vmem:[#allocation5 + $0x1f8] sm:$0xff]
    %v110 = vld [vmem:[#allocation5 + $0x200] sm:$0xff]
    %v111 = vld [vmem:[#allocation5 + $0x208] sm:$0xff]
    %v112 = vld [vmem:[#allocation5 + $0x210] sm:$0xff]
    %v113 = vld [vmem:[#allocation5 + $0x218] sm:$0xff]
    %v114 = vld [vmem:[#allocation5 + $0x220] sm:$0xff]
    %v115 = vld [vmem:[#allocation5 + $0x228] sm:$0xff]
    %v116 = vld [vmem:[#allocation5 + $0x230] sm:$0xff]
    %v117 = vld [vmem:[#allocation5 + $0x238] sm:$0xff]
    %v118 = vld [vmem:[#allocation5 + $0x240] sm:$0xff]
    %v119 = vld [vmem:[#allocation5 + $0x248] sm:$0xff]
    %v120 = vld [vmem:[#allocation5 + $0x250] sm:$0xff]
    %v121 = vld [vmem:[#allocation5 + $0x258] sm:$0xff]
    %v122 = vld [vmem:[#allocation5 + $0x260] sm:$0xff]
    %v123 = vld [vmem:[#allocation5 + $0x268] sm:$0xff]
    %v124 = vld [vmem:[#allocation5 + $0x270] sm:$0xff]
    %v125 = vld [vmem:[#allocation5 + $0x278] sm:$0xff]
    %v126 = vld [vmem:[#allocation5 + $0x280] sm:$0xff]
    %v127 = vld [vmem:[#allocation5 + $0x288] sm:$0xff]
    %v128 = vld [vmem:[#allocation5 + $0x290] sm:$0xff]
    %v129 = vld [vmem:[#allocation5 + $0x298] sm:$0xff]
    %v130 = vld [vmem:[#allocation5 + $0x2a0] sm:$0xff]
    %v131 = vld [vmem:[#allocation5 + $0x2a8] sm:$0xff]
    %v132 = vld [vmem:[#allocation5 + $0x2b0] sm:$0xff]
    %v133 = vld [vmem:[#allocation5 + $0x2b8] sm:$0xff]
    %v134 = vld [vmem:[#allocation5 + $0x2c0] sm:$0xff]
    %v135 = vld [vmem:[#allocation5 + $0x2c8] sm:$0xff]
    %v136 = vld [vmem:[#allocation5 + $0x2d0] sm:$0xff]
    %v137 = vld [vmem:[#allocation5 + $0x2d8] sm:$0xff]
    %v138 = vld [vmem:[#allocation5 + $0x2e0] sm:$0xff]
    %v139 = vld [vmem:[#allocation5 + $0x2e8] sm:$0xff]
    %v140 = vld [vmem:[#allocation5 + $0x2f0] sm:$0xff]
    %v141 = vld [vmem:[#allocation5 + $0x2f8] sm:$0xff]
    %v142 = vld [vmem:[#allocation5 + $0x300] sm:$0xff]
    %v143 = vld [vmem:[#allocation5 + $0x308] sm:$0xff]
    %v144 = vld [vmem:[#allocation5 + $0x310] sm:$0xff]
    %v145 = vld [vmem:[#allocation5 + $0x318] sm:$0xff]
    %v146 = vld [vmem:[#allocation5 + $0x320] sm:$0xff]
    %v147 = vld [vmem:[#allocation5 + $0x328] sm:$0xff]
    %v148 = vld [vmem:[#allocation5 + $0x330] sm:$0xff]
    %v149 = vld [vmem:[#allocation5 + $0x338] sm:$0xff]
    %v150 = vld [vmem:[#allocation5 + $0x340] sm:$0xff]
    %v151 = vld [vmem:[#allocation5 + $0x348] sm:$0xff]
    %v152 = vld [vmem:[#allocation5 + $0x350] sm:$0xff]
    %v153 = vld [vmem:[#allocation5 + $0x358] sm:$0xff]
    %v154 = vld [vmem:[#allocation5 + $0x360] sm:$0xff]
    %v155 = vld [vmem:[#allocation5 + $0x368] sm:$0xff]
    %v156 = vld [vmem:[#allocation5 + $0x370] sm:$0xff]
    %v157 = vld [vmem:[#allocation5 + $0x378] sm:$0xff]
    %v158 = vld [vmem:[#allocation5 + $0x380] sm:$0xff]
    %v159 = vld [vmem:[#allocation5 + $0x388] sm:$0xff]
    %v160 = vld [vmem:[#allocation5 + $0x390] sm:$0xff]
    %v161 = vld [vmem:[#allocation5 + $0x398] sm:$0xff]
    %v162 = vld [vmem:[#allocation5 + $0x3a0] sm:$0xff]
    %v163 = vld [vmem:[#allocation5 + $0x3a8] sm:$0xff]
    %v164 = vld [vmem:[#allocation5 + $0x3b0] sm:$0xff]
    %v165 = vld [vmem:[#allocation5 + $0x3b8] sm:$0xff]
    %v166 = vld [vmem:[#allocation5 + $0x3c0] sm:$0xff]
    %v167 = vld [vmem:[#allocation5 + $0x3c8] sm:$0xff]
    %v168 = vld [vmem:[#allocation5 + $0x3d0] sm:$0xff]
    %v169 = vld [vmem:[#allocation5 + $0x3d8] sm:$0xff]
    %v170 = vld [vmem:[#allocation5 + $0x3e0] sm:$0xff]
    %v171 = vld [vmem:[#allocation5 + $0x3e8] sm:$0xff]
    %v172 = vld [vmem:[#allocation5 + $0x3f0] sm:$0xff]
    %v173 = vld [vmem:[#allocation5 + $0x3f8] sm:$0xff]
    %v174 = vld [vmem:[#allocation5 + $0x400] sm:$0xff]
    %v175 = vld [vmem:[#allocation5 + $0x408] sm:$0xff]
    %v176 = vld [vmem:[#allocation5 + $0x410] sm:$0xff]
    %v177 = vld [vmem:[#allocation5 + $0x418] sm:$0xff]
    %v178 = vld [vmem:[#allocation5 + $0x420] sm:$0xff]
    %v179 = vld [vmem:[#allocation5 + $0x428] sm:$0xff]
    %v180 = vld [vmem:[#allocation5 + $0x430] sm:$0xff]
    %v181 = vld [vmem:[#allocation5 + $0x438] sm:$0xff]
    %v182 = vld [vmem:[#allocation5 + $0x440] sm:$0xff]
    %v183 = vld [vmem:[#allocation5 + $0x448] sm:$0xff]
    %v184 = vld [vmem:[#allocation5 + $0x450] sm:$0xff]
    %v185 = vld [vmem:[#allocation5 + $0x458] sm:$0xff]
    %v186 = vld [vmem:[#allocation5 + $0x460] sm:$0xff]
    %v187 = vld [vmem:[#allocation5 + $0x468] sm:$0xff]
    %v188 = vld [vmem:[#allocation5 + $0x470] sm:$0xff]
    %v189 = vld [vmem:[#allocation5 + $0x478] sm:$0xff]
    %v190 = vld [vmem:[#allocation5 + $0x480] sm:$0xff]
    %v191 = vld [vmem:[#allocation5 + $0x488] sm:$0xff]
    %v192 = vld [vmem:[#allocation5 + $0x490] sm:$0xff]
    %v193 = vld [vmem:[#allocation5 + $0x498] sm:$0xff]
    %v194 = vld [vmem:[#allocation5 + $0x4a0] sm:$0xff]
    %v195 = vld [vmem:[#allocation5 + $0x4a8] sm:$0xff]
    %v196 = vld [vmem:[#allocation5 + $0x4b0] sm:$0xff]
    %v197 = vld [vmem:[#allocation5 + $0x4b8] sm:$0xff]
    %v198 = vld [vmem:[#allocation5 + $0x4c0] sm:$0xff]
    %v199 = vld [vmem:[#allocation5 + $0x4c8] sm:$0xff]
    %v200 = vld [vmem:[#allocation5 + $0x4d0] sm:$0xff]
    %v201 = vld [vmem:[#allocation5 + $0x4d8] sm:$0xff]
    %v202 = vld [vmem:[#allocation5 + $0x4e0] sm:$0xff]
    %v203 = vld [vmem:[#allocation5 + $0x4e8] sm:$0xff]
    %v204 = vld [vmem:[#allocation5 + $0x4f0] sm:$0xff]
    %v205 = vld [vmem:[#allocation5 + $0x4f8] sm:$0xff]
    %v206 = vld [vmem:[#allocation5 + $0x500] sm:$0xff]
    %v207 = vld [vmem:[#allocation5 + $0x508] sm:$0xff]
    %v208 = vld [vmem:[#allocation5 + $0x510] sm:$0xff]
    %v209 = vld [vmem:[#allocation5 + $0x518] sm:$0xff]
    %v210 = vld [vmem:[#allocation5 + $0x520] sm:$0xff]
    %v211 = vld [vmem:[#allocation5 + $0x528] sm:$0xff]
    %v212 = vld [vmem:[#allocation5 + $0x530] sm:$0xff]
    %v213 = vld [vmem:[#allocation5 + $0x538] sm:$0xff]
    %v214 = vld [vmem:[#allocation5 + $0x540] sm:$0xff]
    %v215 = vld [vmem:[#allocation5 + $0x548] sm:$0xff]
    %v216 = vld [vmem:[#allocation5 + $0x550] sm:$0xff]
    %v217 = vld [vmem:[#allocation5 + $0x558] sm:$0xff]
    %v218 = vld [vmem:[#allocation5 + $0x560] sm:$0xff]
    %v219 = vld [vmem:[#allocation5 + $0x568] sm:$0xff]
    %v220 = vld [vmem:[#allocation5 + $0x570] sm:$0xff]
    %v221 = vld [vmem:[#allocation5 + $0x578] sm:$0xff]
    %v222 = vld [vmem:[#allocation5 + $0x580] sm:$0xff]
    %v223 = vld [vmem:[#allocation5 + $0x588] sm:$0xff]
    %v224 = vld [vmem:[#allocation5 + $0x590] sm:$0xff]
    %v225 = vld [vmem:[#allocation5 + $0x598] sm:$0xff]
    %v226 = vld [vmem:[#allocation5 + $0x5a0] sm:$0xff]
    %v227 = vld [vmem:[#allocation5 + $0x5a8] sm:$0xff]
    %v228 = vld [vmem:[#allocation5 + $0x5b0] sm:$0xff]
    %v229 = vld [vmem:[#allocation5 + $0x5b8] sm:$0xff]
    %v230 = vld [vmem:[#allocation5 + $0x5c0] sm:$0xff]
    %v231 = vld [vmem:[#allocation5 + $0x5c8] sm:$0xff]
    %v232 = vld [vmem:[#allocation5 + $0x5d0] sm:$0xff]
    %v233 = vld [vmem:[#allocation5 + $0x5d8] sm:$0xff]
    %v234 = vld [vmem:[#allocation5 + $0x5e0] sm:$0xff]
    %v235 = vld [vmem:[#allocation5 + $0x5e8] sm:$0xff]
    %v236 = vld [vmem:[#allocation5 + $0x5f0] sm:$0xff]
    %v237 = vld [vmem:[#allocation5 + $0x5f8] sm:$0xff]
    %v238 = vld [vmem:[#allocation5 + $0x600] sm:$0xff]
    %v239 = vld [vmem:[#allocation5 + $0x608] sm:$0xff]
    %v240 = vld [vmem:[#allocation5 + $0x610] sm:$0xff]
    %v241 = vld [vmem:[#allocation5 + $0x618] sm:$0xff]
    %v242 = vld [vmem:[#allocation5 + $0x620] sm:$0xff]
    %v243 = vld [vmem:[#allocation5 + $0x628] sm:$0xff]
    %v244 = vld [vmem:[#allocation5 + $0x630] sm:$0xff]
    %v245 = vld [vmem:[#allocation5 + $0x638] sm:$0xff]
    %v246 = vld [vmem:[#allocation5 + $0x640] sm:$0xff]
    %v247 = vld [vmem:[#allocation5 + $0x648] sm:$0xff]
    %v248 = vld [vmem:[#allocation5 + $0x650] sm:$0xff]
    %v249 = vld [vmem:[#allocation5 + $0x658] sm:$0xff]
    %v250 = vld [vmem:[#allocation5 + $0x660] sm:$0xff]
    %v251 = vld [vmem:[#allocation5 + $0x668] sm:$0xff]
    %v252 = vld [vmem:[#allocation5 + $0x670] sm:$0xff]
    %v253 = vld [vmem:[#allocation5 + $0x678] sm:$0xff]
    %v254 = vld [vmem:[#allocation5 + $0x680] sm:$0xff]
    %v255 = vld [vmem:[#allocation5 + $0x688] sm:$0xff]
    %v256 = vld [vmem:[#allocation5 + $0x690] sm:$0xff]
    %v257 = vld [vmem:[#allocation5 + $0x698] sm:$0xff]
    %v258 = vld [vmem:[#allocation5 + $0x6a0] sm:$0xff]
    %v259 = vld [vmem:[#allocation5 + $0x6a8] sm:$0xff]
    %v260 = vld [vmem:[#allocation5 + $0x6b0] sm:$0xff]
    %v261 = vld [vmem:[#allocation5 + $0x6b8] sm:$0xff]
    %v262 = vld [vmem:[#allocation5 + $0x6c0] sm:$0xff]
    %v263 = vld [vmem:[#allocation5 + $0x6c8] sm:$0xff]
    %v264 = vld [vmem:[#allocation5 + $0x6d0] sm:$0xff]
    %v265 = vld [vmem:[#allocation5 + $0x6d8] sm:$0xff]
    %v266 = vld [vmem:[#allocation5 + $0x6e0] sm:$0xff]
    %v267 = vld [vmem:[#allocation5 + $0x6e8] sm:$0xff]
    %v268 = vld [vmem:[#allocation5 + $0x6f0] sm:$0xff]
    %v269 = vld [vmem:[#allocation5 + $0x6f8] sm:$0xff]
    %v270 = vld [vmem:[#allocation5 + $0x700] sm:$0xff]
    %v271 = vld [vmem:[#allocation5 + $0x708] sm:$0xff]
    %v272 = vld [vmem:[#allocation5 + $0x710] sm:$0xff]
    %v273 = vld [vmem:[#allocation5 + $0x718] sm:$0xff]
    %v274 = vld [vmem:[#allocation5 + $0x720] sm:$0xff]
    %v275 = vld [vmem:[#allocation5 + $0x728] sm:$0xff]
    %v276 = vld [vmem:[#allocation5 + $0x730] sm:$0xff]
    %v277 = vld [vmem:[#allocation5 + $0x738] sm:$0xff]
    %v278 = vld [vmem:[#allocation5 + $0x740] sm:$0xff]
    %v279 = vld [vmem:[#allocation5 + $0x748] sm:$0xff]
    %v280 = vld [vmem:[#allocation5 + $0x750] sm:$0xff]
    %v281 = vld [vmem:[#allocation5 + $0x758] sm:$0xff]
    %v282 = vld [vmem:[#allocation5 + $0x760] sm:$0xff]
    %v283 = vld [vmem:[#allocation5 + $0x768] sm:$0xff]
    %v284 = vld [vmem:[#allocation5 + $0x770] sm:$0xff]
    %v285 = vld [vmem:[#allocation5 + $0x778] sm:$0xff]
    %v286 = vld [vmem:[#allocation5 + $0x780] sm:$0xff]
    %v287 = vld [vmem:[#allocation5 + $0x788] sm:$0xff]
    %v288 = vld [vmem:[#allocation5 + $0x790] sm:$0xff]
    %v289 = vld [vmem:[#allocation5 + $0x798] sm:$0xff]
    %v290 = vld [vmem:[#allocation5 + $0x7a0] sm:$0xff]
    %v291 = vld [vmem:[#allocation5 + $0x7a8] sm:$0xff]
    %v292 = vld [vmem:[#allocation5 + $0x7b0] sm:$0xff]
    %v293 = vld [vmem:[#allocation5 + $0x7b8] sm:$0xff]
    %v294 = vld [vmem:[#allocation5 + $0x7c0] sm:$0xff]
    %v295 = vld [vmem:[#allocation5 + $0x7c8] sm:$0xff]
    %v296 = vld [vmem:[#allocation5 + $0x7d0] sm:$0xff]
    %v297 = vld [vmem:[#allocation5 + $0x7d8] sm:$0xff]
    %v298 = vld [vmem:[#allocation5 + $0x7e0] sm:$0xff]
    %v299 = vld [vmem:[#allocation5 + $0x7e8] sm:$0xff]
    %v300 = vld [vmem:[#allocation5 + $0x7f0] sm:$0xff]
    %v301 = vld [vmem:[#allocation5 + $0x7f8] sm:$0xff]
    %302 = vmatprep.subr.mxu0 %v47
    %303 = vmatpush1.msra.mxu0 %v46
    %304 = vmatprep.subr.mxu0 %v55
    %305 = vmatpush1.msra.mxu0 %v54
    %306 = vmatprep.subr.mxu0 %v63
    %307 = vmatpush1.msra.mxu0 %v62
    %308 = vmatprep.subr.mxu0 %v71
    %309 = vmatpush1.msra.mxu0 %v70
    %310 = vmatprep.subr.mxu0 %v79
    %311 = vmatpush1.msra.mxu0 %v78
    %312 = vmatprep.subr.mxu0 %v87
    %313 = vmatpush1.msra.mxu0 %v86
    %314 = vmatprep.subr.mxu0 %v95
    %315 = vmatpush1.msra.mxu0 %v94
    %316 = vmatprep.subr.mxu0 %v103
    %317 = vmatpush1.msra.mxu0 %v102
    %318 = vmatprep.subr.mxu0 %v111
    %319 = vmatpush1.msra.mxu0 %v110
    %320 = vmatprep.subr.mxu0 %v119
    %321 = vmatpush1.msra.mxu0 %v118
    %322 = vmatprep.subr.mxu0 %v127
    %323 = vmatpush1.msra.mxu0 %v126
    %324 = vmatprep.subr.mxu0 %v135
    %325 = vmatpush1.msra.mxu0 %v134
    %326 = vmatprep.subr.mxu0 %v143
    %327 = vmatpush1.msra.mxu0 %v142
    %328 = vmatprep.subr.mxu0 %v151
    %329 = vmatpush1.msra.mxu0 %v150
    %330 = vmatprep.subr.mxu0 %v159
    %331 = vmatpush1.msra.mxu0 %v158
    %332 = vmatprep.subr.mxu0 %v167
    %333 = vmatpush1.msra.mxu0 %v166
    %334 = vmatprep.subr.mxu0 %v175
    %335 = vmatpush1.msra.mxu0 %v174
    %336 = vmatprep.subr.mxu0 %v183
    %337 = vmatpush1.msra.mxu0 %v182
    %338 = vmatprep.subr.mxu0 %v191
    %339 = vmatpush1.msra.mxu0 %v190
    %340 = vmatprep.subr.mxu0 %v199
    %341 = vmatpush1.msra.mxu0 %v198
    %342 = vmatprep.subr.mxu0 %v207
    %343 = vmatpush1.msra.mxu0 %v206
    %344 = vmatprep.subr.mxu0 %v215
    %345 = vmatpush1.msra.mxu0 %v214
    %346 = vmatprep.subr.mxu0 %v223
    %347 = vmatpush1.msra.mxu0 %v222
    %348 = vmatprep.subr.mxu0 %v231
    %349 = vmatpush1.msra.mxu0 %v230
    %350 = vmatprep.subr.mxu0 %v239
    %351 = vmatpush1.msra.mxu0 %v238
    %352 = vmatprep.subr.mxu0 %v247
    %353 = vmatpush1.msra.mxu0 %v246
    %354 = vmatprep.subr.mxu0 %v255
    %355 = vmatpush1.msra.mxu0 %v254
    %356 = vmatprep.subr.mxu0 %v263
    %357 = vmatpush1.msra.mxu0 %v262
    %358 = vmatprep.subr.mxu0 %v271
    %359 = vmatpush1.msra.mxu0 %v270
    %360 = vmatprep.subr.mxu0 %v279
    %361 = vmatpush1.msra.mxu0 %v278
    %362 = vmatprep.subr.mxu0 %v287
    %363 = vmatpush1.msra.mxu0 %v286
    %364 = vmatprep.subr.mxu0 %v295
    %365 = vmatpush1.msra.mxu0 %v294
    %366 = vmatprep.mubr.f32.mxu0 %v41
    %367 = vmatmul.mubr.f32.gmra.mrb[0].mxu0 %v40
    %v368 = vpop.f32.mrb[0].mxu0
    %v369 = vadd.f32 0.0, %v368
    %v370 = vpop.f32.mrb[0].mxu0
    %v371 = vadd.f32 0.0, %v370
    %372 = vmatprep.mubr.f32.mxu0 %v43
    %373 = vmatmul.mubr.f32.gmra.mrb[0].mxu0 %v42
    %v374 = vpop.f32.mrb[0].mxu0
    %v375 = vadd.f32 0.0, %v374
    %v376 = vpop.f32.mrb[0].mxu0
    %v377 = vadd.f32 0.0, %v376
    %378 = vmatprep.mubr.f32.mxu0 %v45
    %379 = vmatmul.mubr.f32.gmra.mrb[0].mxu0 %v44
    %v380 = vpop.f32.mrb[0].mxu0
    %v381 = vadd.f32 0.0, %v380
    %v382 = vpop.f32.mrb[0].mxu0
    %v383 = vadd.f32 0.0, %v382
    %384 = vdwg.mxu0
    %385 = vmatprep.subr.mxu0 %v49
    %386 = vmatpush1.msra.mxu0 %v48
    %387 = vmatprep.subr.mxu0 %v57
    %388 = vmatpush1.msra.mxu0 %v56
    %389 = vmatprep.subr.mxu0 %v65
    %390 = vmatpush1.msra.mxu0 %v64
    %391 = vmatprep.subr.mxu0 %v73
    %392 = vmatpush1.msra.mxu0 %v72
    %393 = vmatprep.subr.mxu0 %v81
    %394 = vmatpush1.msra.mxu0 %v80
    %395 = vmatprep.subr.mxu0 %v89
    %396 = vmatpush1.msra.mxu0 %v88
    %397 = vmatprep.subr.mxu0 %v97
    %398 = vmatpush1.msra.mxu0 %v96
    %399 = vmatprep.subr.mxu0 %v105
    %400 = vmatpush1.msra.mxu0 %v104
    %401 = vmatprep.subr.mxu0 %v113
    %402 = vmatpush1.msra.mxu0 %v112
    %403 = vmatprep.subr.mxu0 %v121
    %404 = vmatpush1.msra.mxu0 %v120
    %405 = vmatprep.subr.mxu0 %v129
    %406 = vmatpush1.msra.mxu0 %v128
    %407 = vmatprep.subr.mxu0 %v137
    %408 = vmatpush1.msra.mxu0 %v136
    %409 = vmatprep.subr.mxu0 %v145
    %410 = vmatpush1.msra.mxu0 %v144
    %411 = vmatprep.subr.mxu0 %v153
    %412 = vmatpush1.msra.mxu0 %v152
    %413 = vmatprep.subr.mxu0 %v161
    %414 = vmatpush1.msra.mxu0 %v160
    %415 = vmatprep.subr.mxu0 %v169
    %416 = vmatpush1.msra.mxu0 %v168
    %417 = vmatprep.subr.mxu0 %v177
    %418 = vmatpush1.msra.mxu0 %v176
    %419 = vmatprep.subr.mxu0 %v185
    %420 = vmatpush1.msra.mxu0 %v184
    %421 = vmatprep.subr.mxu0 %v193
    %422 = vmatpush1.msra.mxu0 %v192
    %423 = vmatprep.subr.mxu0 %v201
    %424 = vmatpush1.msra.mxu0 %v200
    %425 = vmatprep.subr.mxu0 %v209
    %426 = vmatpush1.msra.mxu0 %v208
    %427 = vmatprep.subr.mxu0 %v217
    %428 = vmatpush1.msra.mxu0 %v216
    %429 = vmatprep.subr.mxu0 %v225
    %430 = vmatpush1.msra.mxu0 %v224
    %431 = vmatprep.subr.mxu0 %v233
    %432 = vmatpush1.msra.mxu0 %v232
    %433 = vmatprep.subr.mxu0 %v241
    %434 = vmatpush1.msra.mxu0 %v240
    %435 = vmatprep.subr.mxu0 %v249
    %436 = vmatpush1.msra.mxu0 %v248
    %437 = vmatprep.subr.mxu0 %v257
    %438 = vmatpush1.msra.mxu0 %v256
    %439 = vmatprep.subr.mxu0 %v265
    %440 = vmatpush1.msra.mxu0 %v264
    %441 = vmatprep.subr.mxu0 %v273
    %442 = vmatpush1.msra.mxu0 %v272
    %443 = vmatprep.subr.mxu0 %v281
    %444 = vmatpush1.msra.mxu0 %v280
    %445 = vmatprep.subr.mxu0 %v289
    %446 = vmatpush1.msra.mxu0 %v288
    %447 = vmatprep.subr.mxu0 %v297
    %448 = vmatpush1.msra.mxu0 %v296
    %449 = vmatprep.mubr.f32.mxu0 %v41
    %450 = vmatmul.mubr.f32.gmra.mrb[0].mxu0 %v40
    %v451 = vpop.f32.mrb[0].mxu0
    %v452 = vadd.f32 0.0, %v451
    %v453 = vpop.f32.mrb[0].mxu0
    %v454 = vadd.f32 0.0, %v453
    %455 = vmatprep.mubr.f32.mxu0 %v43
    %456 = vmatmul.mubr.f32.gmra.mrb[0].mxu0 %v42
    %v457 = vpop.f32.mrb[0].mxu0
    %v458 = vadd.f32 0.0, %v457
    %v459 = vpop.f32.mrb[0].mxu0
    %v460 = vadd.f32 0.0, %v459
    %461 = vmatprep.mubr.f32.mxu0 %v45
    %462 = vmatmul.mubr.f32.gmra.mrb[0].mxu0 %v44
    %v463 = vpop.f32.mrb[0].mxu0
    %v464 = vadd.f32 0.0, %v463
    %v465 = vpop.f32.mrb[0].mxu0
    %v466 = vadd.f32 0.0, %v465
    %467 = vdwg.mxu0
    %468 = vmatprep.subr.mxu0 %v51
    %469 = vmatpush1.msra.mxu0 %v50
    %470 = vmatprep.subr.mxu0 %v59
    %471 = vmatpush1.msra.mxu0 %v58
    %472 = vmatprep.subr.mxu0 %v67
    %473 = vmatpush1.msra.mxu0 %v66
    %474 = vmatprep.subr.mxu0 %v75
    %475 = vmatpush1.msra.mxu0 %v74
    %476 = vmatprep.subr.mxu0 %v83
    %477 = vmatpush1.msra.mxu0 %v82
    %478 = vmatprep.subr.mxu0 %v91
    %479 = vmatpush1.msra.mxu0 %v90
    %480 = vmatprep.subr.mxu0 %v99
    %481 = vmatpush1.msra.mxu0 %v98
    %482 = vmatprep.subr.mxu0 %v107
    %483 = vmatpush1.msra.mxu0 %v106
    %484 = vmatprep.subr.mxu0 %v115
    %485 = vmatpush1.msra.mxu0 %v114
    %486 = vmatprep.subr.mxu0 %v123
    %487 = vmatpush1.msra.mxu0 %v122
    %488 = vmatprep.subr.mxu0 %v131
    %489 = vmatpush1.msra.mxu0 %v130
    %490 = vmatprep.subr.mxu0 %v139
    %491 = vmatpush1.msra.mxu0 %v138
    %492 = vmatprep.subr.mxu0 %v147
    %493 = vmatpush1.msra.mxu0 %v146
    %494 = vmatprep.subr.mxu0 %v155
    %495 = vmatpush1.msra.mxu0 %v154
    %496 = vmatprep.subr.mxu0 %v163
    %497 = vmatpush1.msra.mxu0 %v162
    %498 = vmatprep.subr.mxu0 %v171
    %499 = vmatpush1.msra.mxu0 %v170
    %500 = vmatprep.subr.mxu0 %v179
    %501 = vmatpush1.msra.mxu0 %v178
    %502 = vmatprep.subr.mxu0 %v187
    %503 = vmatpush1.msra.mxu0 %v186
    %504 = vmatprep.subr.mxu0 %v195
    %505 = vmatpush1.msra.mxu0 %v194
    %506 = vmatprep.subr.mxu0 %v203
    %507 = vmatpush1.msra.mxu0 %v202
    %508 = vmatprep.subr.mxu0 %v211
    %509 = vmatpush1.msra.mxu0 %v210
    %510 = vmatprep.subr.mxu0 %v219
    %511 = vmatpush1.msra.mxu0 %v218
    %512 = vmatprep.subr.mxu0 %v227
    %513 = vmatpush1.msra.mxu0 %v226
    %514 = vmatprep.subr.mxu0 %v235
    %515 = vmatpush1.msra.mxu0 %v234
    %516 = vmatprep.subr.mxu0 %v243
    %517 = vmatpush1.msra.mxu0 %v242
    %518 = vmatprep.subr.mxu0 %v251
    %519 = vmatpush1.msra.mxu0 %v250
    %520 = vmatprep.subr.mxu0 %v259
    %521 = vmatpush1.msra.mxu0 %v258
    %522 = vmatprep.subr.mxu0 %v267
    %523 = vmatpush1.msra.mxu0 %v266
    %524 = vmatprep.subr.mxu0 %v275
    %525 = vmatpush1.msra.mxu0 %v274
    %526 = vmatprep.subr.mxu0 %v283
    %527 = vmatpush1.msra.mxu0 %v282
    %528 = vmatprep.subr.mxu0 %v291
    %529 = vmatpush1.msra.mxu0 %v290
    %530 = vmatprep.subr.mxu0 %v299
    %531 = vmatpush1.msra.mxu0 %v298
    %532 = vmatprep.mubr.f32.mxu0 %v41
    %533 = vmatmul.mubr.f32.gmra.mrb[0].mxu0 %v40
    %v534 = vpop.f32.mrb[0].mxu0
    %v535 = vadd.f32 0.0, %v534
    %v536 = vpop.f32.mrb[0].mxu0
    %v537 = vadd.f32 0.0, %v536
    %538 = vmatprep.mubr.f32.mxu0 %v43
    %539 = vmatmul.mubr.f32.gmra.mrb[0].mxu0 %v42
    %v540 = vpop.f32.mrb[0].mxu0
    %v541 = vadd.f32 0.0, %v540
    %v542 = vpop.f32.mrb[0].mxu0
    %v543 = vadd.f32 0.0, %v542
    %544 = vmatprep.mubr.f32.mxu0 %v45
    %545 = vmatmul.mubr.f32.gmra.mrb[0].mxu0 %v44
    %v546 = vpop.f32.mrb[0].mxu0
    %v547 = vadd.f32 0.0, %v546
    %v548 = vpop.f32.mrb[0].mxu0
    %v549 = vadd.f32 0.0, %v548
    %550 = vdwg.mxu0
    %551 = vmatprep.subr.mxu0 %v53
    %552 = vmatpush1.msra.mxu0 %v52
    %553 = vmatprep.subr.mxu0 %v61
    %554 = vmatpush1.msra.mxu0 %v60
    %555 = vmatprep.subr.mxu0 %v69
    %556 = vmatpush1.msra.mxu0 %v68
    %557 = vmatprep.subr.mxu0 %v77
    %558 = vmatpush1.msra.mxu0 %v76
    %559 = vmatprep.subr.mxu0 %v85
    %560 = vmatpush1.msra.mxu0 %v84
    %561 = vmatprep.subr.mxu0 %v93
    %562 = vmatpush1.msra.mxu0 %v92
    %563 = vmatprep.subr.mxu0 %v101
    %564 = vmatpush1.msra.mxu0 %v100
    %565 = vmatprep.subr.mxu0 %v109
    %566 = vmatpush1.msra.mxu0 %v108
    %567 = vmatprep.subr.mxu0 %v117
    %568 = vmatpush1.msra.mxu0 %v116
    %569 = vmatprep.subr.mxu0 %v125
    %570 = vmatpush1.msra.mxu0 %v124
    %571 = vmatprep.subr.mxu0 %v133
    %572 = vmatpush1.msra.mxu0 %v132
    %573 = vmatprep.subr.mxu0 %v141
    %574 = vmatpush1.msra.mxu0 %v140
    %575 = vmatprep.subr.mxu0 %v149
    %576 = vmatpush1.msra.mxu0 %v148
    %577 = vmatprep.subr.mxu0 %v157
    %578 = vmatpush1.msra.mxu0 %v156
    %579 = vmatprep.subr.mxu0 %v165
    %580 = vmatpush1.msra.mxu0 %v164
    %581 = vmatprep.subr.mxu0 %v173
    %582 = vmatpush1.msra.mxu0 %v172
    %583 = vmatprep.subr.mxu0 %v181
    %584 = vmatpush1.msra.mxu0 %v180
    %585 = vmatprep.subr.mxu0 %v189
    %586 = vmatpush1.msra.mxu0 %v188
    %587 = vmatprep.subr.mxu0 %v197
    %588 = vmatpush1.msra.mxu0 %v196
    %589 = vmatprep.subr.mxu0 %v205
    %590 = vmatpush1.msra.mxu0 %v204
    %591 = vmatprep.subr.mxu0 %v213
    %592 = vmatpush1.msra.mxu0 %v212
    %593 = vmatprep.subr.mxu0 %v221
    %594 = vmatpush1.msra.mxu0 %v220
    %595 = vmatprep.subr.mxu0 %v229
    %596 = vmatpush1.msra.mxu0 %v228
    %597 = vmatprep.subr.mxu0 %v237
    %598 = vmatpush1.msra.mxu0 %v236
    %599 = vmatprep.subr.mxu0 %v245
    %600 = vmatpush1.msra.mxu0 %v244
    %601 = vmatprep.subr.mxu0 %v253
    %602 = vmatpush1.msra.mxu0 %v252
    %603 = vmatprep.subr.mxu0 %v261
    %604 = vmatpush1.msra.mxu0 %v260
    %605 = vmatprep.subr.mxu0 %v269
    %606 = vmatpush1.msra.mxu0 %v268
    %607 = vmatprep.subr.mxu0 %v277
    %608 = vmatpush1.msra.mxu0 %v276
    %609 = vmatprep.subr.mxu0 %v285
    %610 = vmatpush1.msra.mxu0 %v284
    %611 = vmatprep.subr.mxu0 %v293
    %612 = vmatpush1.msra.mxu0 %v292
    %613 = vmatprep.subr.mxu0 %v301
    %614 = vmatpush1.msra.mxu0 %v300
    %615 = vmatprep.mubr.f32.mxu0 %v41
    %616 = vmatmul.mubr.f32.gmra.mrb[0].mxu0 %v40
    %v617 = vpop.f32.mrb[0].mxu0
    %v618 = vadd.f32 0.0, %v617
    %v619 = vpop.f32.mrb[0].mxu0
    %v620 = vadd.f32 0.0, %v619
    %621 = vmatprep.mubr.f32.mxu0 %v43
    %622 = vmatmul.mubr.f32.gmra.mrb[0].mxu0 %v42
    %v623 = vpop.f32.mrb[0].mxu0
    %v624 = vadd.f32 0.0, %v623
    %v625 = vpop.f32.mrb[0].mxu0
    %v626 = vadd.f32 0.0, %v625
    %627 = vmatprep.mubr.f32.mxu0 %v45
    %628 = vmatmul.mubr.f32.gmra.mrb[0].mxu0 %v44
    %v629 = vpop.f32.mrb[0].mxu0
    %v630 = vadd.f32 0.0, %v629
    %v631 = vpop.f32.mrb[0].mxu0
    %v632 = vadd.f32 0.0, %v631
    %633 = vdwg.mxu0
    %634 = vst [vmem:[#allocation7] sm:$0xff] %v369
    %635 = vst [vmem:[#allocation7 + $0x8] sm:$0xff] %v371
    %636 = vst [vmem:[#allocation7 + $0x10] sm:$0xff] %v452
    %637 = vst [vmem:[#allocation7 + $0x18] sm:$0xff] %v454
    %638 = vst [vmem:[#allocation7 + $0x20] sm:$0xff] %v535
    %639 = vst [vmem:[#allocation7 + $0x28] sm:$0xff] %v537
    %640 = vst [vmem:[#allocation7 + $0x30] sm:$0xff] %v618
    %641 = vst [vmem:[#allocation7 + $0x38] sm:$0xff] %v620
    %642 = vst [vmem:[#allocation7 + $0x40] sm:$0xff] %v375
    %643 = vst [vmem:[#allocation7 + $0x48] sm:$0xff] %v377
    %644 = vst [vmem:[#allocation7 + $0x50] sm:$0xff] %v458
    %645 = vst [vmem:[#allocation7 + $0x58] sm:$0xff] %v460
    %646 = vst [vmem:[#allocation7 + $0x60] sm:$0xff] %v541
    %647 = vst [vmem:[#allocation7 + $0x68] sm:$0xff] %v543
    %648 = vst [vmem:[#allocation7 + $0x70] sm:$0xff] %v624
    %649 = vst [vmem:[#allocation7 + $0x78] sm:$0xff] %v626
    %650 = vst [vmem:[#allocation7 + $0x80] sm:$0xff] %v381
    %651 = vst [vmem:[#allocation7 + $0x88] sm:$0xff] %v383
    %652 = vst [vmem:[#allocation7 + $0x90] sm:$0xff] %v464
    %653 = vst [vmem:[#allocation7 + $0x98] sm:$0xff] %v466
    %654 = vst [vmem:[#allocation7 + $0xa0] sm:$0xff] %v547
    %655 = vst [vmem:[#allocation7 + $0xa8] sm:$0xff] %v549
    %656 = vst [vmem:[#allocation7 + $0xb0] sm:$0xff] %v630
    %657 = vst [vmem:[#allocation7 + $0xb8] sm:$0xff] %v632
    // Predicated region
    $region18: #{tpu_custom_call.1} parent=1 // pred_check
      _
    $region19: #{tpu_custom_call.1} parent=1 // pred_check_branch
      %659 = sbr.rel (0) target = $region21
    $region20: #{tpu_custom_call.1} parent=1 // pred_region
      %s661 = ssub.s32 3072, 3072
      %662 = vsyncadd [#allocation4], %s661
      %s663 = sshll.u32 [#allocation7], 4
      %s664 = int_to_ptr.vmem [resolvable:$true] %s663
      %669 = dma.vmem_to_hbm [thread:$0]  %s664, 3072, %s2, [#allocation4], 1024, 1024, 64
    $region21: #{tpu_custom_call.1} parent=1 // pred_fallthru
      _
    // Predicated region
    $region22: #{tpu_custom_call.1} parent=1 // pred_check
      _
    $region23: #{tpu_custom_call.1} parent=1 // pred_check_branch
      %671 = sbr.rel (0) target = $region25
    $region24: #{tpu_custom_call.1} parent=1 // pred_region
      %672 = dma.done [#allocation4], 3072
    $region25: #{tpu_custom_call.1} parent=1 // pred_fallthru
      _
    %673 = vsyncpa [#allocation3], 1
    %674 = vsyncpa [#allocation6], 1
    %675 = vsyncpa [#allocation4], 1

</llo_original>
